<compile_context>
chip_gen: v7x
topology: tpu7x:2x2x1
jax: 0.10.0
libtpu: 0.0.40
codegen_flags: <defaults>
</compile_context>

<pallas_src>
import jax
import jax.numpy as jnp
from jax.experimental import pallas as pl
from jax.experimental.pallas import tpu as pltpu

HIDDEN_DIM = 16                 # config_word2vec.hidden_dim (synthetic small config)
D = 2 * HIDDEN_DIM              # hidden_dim * 2
MAX_ENC_STEPS = 8               # config_word2vec.max_enc_steps


def _senti_attn_kernel(h_ref, mask_ref, wh_ref, bh_ref, v1_ref, v2_ref,
                       au_ref, et2_ref):
    TB, T, Dd = h_ref.shape

    # et = tanh(W_h h): single (TB*T, D) x (D, D) MXU matmul per batch block.
    h_flat = h_ref[...].reshape(TB * T, Dd)
    et_flat = jnp.tanh(
        jnp.dot(h_flat, wh_ref[...], preferred_element_type=jnp.float32)
        + bh_ref[...])                                        # (TB*T, D)
    et = et_flat.reshape(TB, T, Dd)                           # (TB, T, D)

    # au = normalize_T( sigmoid(v1 . et) * mask )
    s1 = jnp.sum(et * v1_ref[...], axis=-1)                   # (TB, T)
    au = jax.nn.sigmoid(s1) * mask_ref[...]                   # (TB, T)
    norm = jnp.sum(au, axis=-1, keepdims=True)                # (TB, 1)
    au_ref[...] = au * pl.reciprocal(norm)                    # exact reciprocal

    # et2 = sigmoid( v2 . et over the (zero-padded) time axis )
    s2 = jnp.sum(et * v2_ref[...][:, :, None], axis=1)        # (TB, D)
    et2_ref[...] = jax.nn.sigmoid(s2)


def sentiment_attention(h, enc_padding_mask, params, max_enc_steps=MAX_ENC_STEPS):
    """Returns (au, et2) exactly like the PyTorch module's forward."""
    B, T, Dd = h.shape

    # Pre-transpose / reshape weights once in the wrapper (PyTorch Linear stores (out, in)).
    wh_t = params["W_h"].T                       # (Dd, Dd): kernel computes x @ W_h^T via x @ wh_t
    bh = params["b_h"].reshape(1, Dd)            # (1, Dd)
    v1 = params["v1"].reshape(1, Dd)             # (1, Dd)
    v2 = params["v2"][:, :T]                     # (1, T): zero-padded tail never contributes

    # Batch blocking: whole batch if small, otherwise 512-row (multiple-of-8) blocks.
    tb = B if B <= 512 else 512
    grid = (pl.cdiv(B, tb),)

    out_shape = (jax.ShapeDtypeStruct((B, T), jnp.float32),
                 jax.ShapeDtypeStruct((B, Dd), jnp.float32))

    au, et2 = pl.pallas_call(
        _senti_attn_kernel,
        grid_spec=pltpu.PrefetchScalarGridSpec(
            num_scalar_prefetch=0,
            grid=grid,
            in_specs=[
                pl.BlockSpec((tb, T, Dd), lambda b: (b, 0, 0)),   # h
                pl.BlockSpec((tb, T), lambda b: (b, 0)),          # enc_padding_mask
                pl.BlockSpec((Dd, Dd), lambda b: (0, 0)),         # W_h (pre-transposed)
                pl.BlockSpec((1, Dd), lambda b: (0, 0)),          # b_h
                pl.BlockSpec((1, Dd), lambda b: (0, 0)),          # v1
                pl.BlockSpec((1, T), lambda b: (0, 0)),           # v2[:, :T]
            ],
            out_specs=[
                pl.BlockSpec((tb, T), lambda b: (b, 0)),          # au
                pl.BlockSpec((tb, Dd), lambda b: (b, 0)),         # et2
            ],
        ),
        out_shape=out_shape,
        compiler_params=pltpu.CompilerParams(
            dimension_semantics=("parallel",)),
    )(h, enc_padding_mask, wh_t, bh, v1, v2)
    return au, et2


def _ref_forward(h, enc_padding_mask, params, max_enc_steps):
    """Pure-JAX reference mirroring the PyTorch forward."""
    et = jnp.einsum("btd,ed->bte", h, params["W_h"]) + params["b_h"]
    et = jnp.tanh(et)
    et1 = jax.nn.sigmoid(jnp.einsum("btd,kd->btk", et, params["v1"])[..., 0])
    au = et1 * enc_padding_mask
    au = au / jnp.sum(au, axis=1, keepdims=True)
    B, Tt, Dd = h.shape
    et_p = jnp.transpose(et, (0, 2, 1))                       # (B, D, T)
    if Tt < max_enc_steps:
        pad = jnp.zeros((B, Dd, max_enc_steps - Tt), et_p.dtype)
        et_p = jnp.concatenate([et_p, pad], axis=2)
    et2 = jax.nn.sigmoid(jnp.einsum("bdt,kt->bdk", et_p, params["v2"])[..., 0])
    return au, et2


def _init_params(key, max_enc_steps=MAX_ENC_STEPS):
    """Deterministic PyTorch-Linear-style init (uniform +-1/sqrt(fan_in))."""
    k1, k2, k3, k4 = jax.random.split(key, 4)
    bd = 1.0 / jnp.sqrt(jnp.float32(D))
    bt = 1.0 / jnp.sqrt(jnp.float32(max_enc_steps))
    return {
        "W_h": jax.random.uniform(k1, (D, D), jnp.float32, -bd, bd),
        "b_h": jax.random.uniform(k2, (D,), jnp.float32, -bd, bd),
        "v1":  jax.random.uniform(k3, (1, D), jnp.float32, -bd, bd),
        "v2":  jax.random.uniform(k4, (1, max_enc_steps), jnp.float32, -bt, bt),
    }


if __name__ == "__main__":
    B, T = 2, MAX_ENC_STEPS
    key = jax.random.PRNGKey(0)
    kp, kh = jax.random.split(key)

    params = _init_params(kp)
    h = jax.random.normal(kh, (B, T, D), jnp.float32)
    # padding mask: first example fully valid, second has 5 valid tokens
    enc_padding_mask = jnp.array(
        [[1.0] * T, [1.0] * 5 + [0.0] * (T - 5)], jnp.float32)

    au, et2 = sentiment_attention(h, enc_padding_mask, params)
    au = jax.block_until_ready(au)
    et2 = jax.block_until_ready(et2)

    au_r, et2_r = _ref_forward(h, enc_padding_mask, params, MAX_ENC_STEPS)
    assert jnp.allclose(au, au_r, atol=1e-5, rtol=1e-5), float(jnp.max(jnp.abs(au - au_r)))
    assert jnp.allclose(et2, et2_r, atol=1e-5, rtol=1e-5), float(jnp.max(jnp.abs(et2 - et2_r)))

    print("KERNEL_OK")
</pallas_src>

<mosaic_0001>
module attributes {stable_mosaic.version = 11 : i64} {
  func.func @_senti_attn_kernel(%arg0: i32, %arg1: memref<2x8x32xf32, #tpu.memory_space<vmem>>, %arg2: memref<2x8xf32, #tpu.memory_space<vmem>>, %arg3: memref<32x32xf32, #tpu.memory_space<vmem>>, %arg4: memref<1x32xf32, #tpu.memory_space<vmem>>, %arg5: memref<1x32xf32, #tpu.memory_space<vmem>>, %arg6: memref<1x8xf32, #tpu.memory_space<vmem>>, %arg7: memref<2x8xf32, #tpu.memory_space<vmem>>, %arg8: memref<2x32xf32, #tpu.memory_space<vmem>>) attributes {dimension_semantics = [#tpu.dimension_semantics<parallel>], iteration_bounds = array<i64: 1>, scalar_prefetch = 0 : i64, scratch_operands = 0 : i64, tpu.core_type = #tpu.core_type<tc>, window_params = [{transform_indices = @transform_0, window_bounds = array<i64: 2, 8, 32>}, {transform_indices = @transform_1, window_bounds = array<i64: 2, 8>}, {pipeline_mode = #tpu.pipeline_mode<synchronous>, transform_indices = @transform_2, window_bounds = array<i64: 32, 32>}, {pipeline_mode = #tpu.pipeline_mode<synchronous>, transform_indices = @transform_3, window_bounds = array<i64: 1, 32>}, {pipeline_mode = #tpu.pipeline_mode<synchronous>, transform_indices = @transform_4, window_bounds = array<i64: 1, 32>}, {pipeline_mode = #tpu.pipeline_mode<synchronous>, transform_indices = @transform_5, window_bounds = array<i64: 1, 8>}, {transform_indices = @transform_6, window_bounds = array<i64: 2, 8>}, {transform_indices = @transform_7, window_bounds = array<i64: 2, 32>}]} {
    %c0 = arith.constant 0 : index
    %c0_0 = arith.constant 0 : index
    %c0_1 = arith.constant 0 : index
    %0 = vector.load %arg1[%c0, %c0_0, %c0_1] : memref<2x8x32xf32, #tpu.memory_space<vmem>>, vector<2x8x32xf32>
    %1 = vector.shape_cast %0 : vector<2x8x32xf32> to vector<16x32xf32>
    %c0_2 = arith.constant 0 : index
    %c0_3 = arith.constant 0 : index
    %2 = vector.load %arg3[%c0_2, %c0_3] : memref<32x32xf32, #tpu.memory_space<vmem>>, vector<32x32xf32>
    %cst = arith.constant dense<0.000000e+00> : vector<16x32xf32>
    %3 = tpu.matmul %1, %2, %cst {dimension_numbers = #tpu.dot_dimension_numbers<[1], [0], [0], [1], [0, 0, 1, 1], [], []>} : vector<16x32xf32>, vector<32x32xf32>, vector<16x32xf32> -> vector<16x32xf32>
    %c0_4 = arith.constant 0 : index
    %c0_5 = arith.constant 0 : index
    %4 = vector.load %arg4[%c0_4, %c0_5] : memref<1x32xf32, #tpu.memory_space<vmem>>, vector<1x32xf32>
    %5 = vector.broadcast %4 : vector<1x32xf32> to vector<16x32xf32>
    %6 = arith.addf %3, %5 : vector<16x32xf32>
    %7 = math.tanh %6 : vector<16x32xf32>
    %8 = vector.shape_cast %7 : vector<16x32xf32> to vector<2x8x32xf32>
    %c0_6 = arith.constant 0 : index
    %c0_7 = arith.constant 0 : index
    %9 = vector.load %arg5[%c0_6, %c0_7] : memref<1x32xf32, #tpu.memory_space<vmem>>, vector<1x32xf32>
    %10 = vector.shape_cast %9 : vector<1x32xf32> to vector<1x1x32xf32>
    %11 = vector.broadcast %10 : vector<1x1x32xf32> to vector<2x8x32xf32>
    %12 = arith.mulf %8, %11 : vector<2x8x32xf32>
    %cst_8 = arith.constant dense<0.000000e+00> : vector<2x8xf32>
    %13 = vector.multi_reduction <add>, %12, %cst_8 [2] : vector<2x8x32xf32> to vector<2x8xf32>
    %14 = arith.negf %13 : vector<2x8xf32>
    %15 = math.exp %14 : vector<2x8xf32>
    %cst_9 = arith.constant 1.000000e+00 : f32
    %16 = vector.broadcast %cst_9 : f32 to vector<2x8xf32>
    %17 = arith.addf %16, %15 : vector<2x8xf32>
    %18 = arith.divf %16, %17 : vector<2x8xf32>
    %c0_10 = arith.constant 0 : index
    %c0_11 = arith.constant 0 : index
    %19 = vector.load %arg2[%c0_10, %c0_11] : memref<2x8xf32, #tpu.memory_space<vmem>>, vector<2x8xf32>
    %20 = arith.mulf %18, %19 : vector<2x8xf32>
    %cst_12 = arith.constant dense<0.000000e+00> : vector<2xf32>
    %21 = vector.multi_reduction <add>, %20, %cst_12 [1] : vector<2x8xf32> to vector<2xf32>
    %22 = vector.shape_cast %21 : vector<2xf32> to vector<2x1xf32>
    %23 = tpu.reciprocal %22 : vector<2x1xf32> -> vector<2x1xf32>
    %24 = vector.broadcast %23 : vector<2x1xf32> to vector<2x8xf32>
    %25 = arith.mulf %20, %24 : vector<2x8xf32>
    %c0_13 = arith.constant 0 : index
    %c0_14 = arith.constant 0 : index
    %26 = vector.load %arg7[%c0_13, %c0_14] : memref<2x8xf32, #tpu.memory_space<vmem>>, vector<2x8xf32>
    tpu.vector_store %arg7[%c0_13, %c0_14], %25 {strides = array<i32>} : memref<2x8xf32, #tpu.memory_space<vmem>>, vector<2x8xf32>,
    %c0_15 = arith.constant 0 : index
    %c0_16 = arith.constant 0 : index
    %27 = vector.load %arg6[%c0_15, %c0_16] : memref<1x8xf32, #tpu.memory_space<vmem>>, vector<1x8xf32>
    %28 = vector.shape_cast %27 : vector<1x8xf32> to vector<1x8x1xf32>
    %29 = vector.broadcast %28 : vector<1x8x1xf32> to vector<2x8x32xf32>
    %30 = arith.mulf %8, %29 : vector<2x8x32xf32>
    %cst_17 = arith.constant dense<0.000000e+00> : vector<2x32xf32>
    %31 = vector.multi_reduction <add>, %30, %cst_17 [1] : vector<2x8x32xf32> to vector<2x32xf32>
    %32 = arith.negf %31 : vector<2x32xf32>
    %33 = math.exp %32 : vector<2x32xf32>
    %cst_18 = arith.constant 1.000000e+00 : f32
    %34 = vector.broadcast %cst_18 : f32 to vector<2x32xf32>
    %35 = arith.addf %34, %33 : vector<2x32xf32>
    %36 = arith.divf %34, %35 : vector<2x32xf32>
    %c0_19 = arith.constant 0 : index
    %c0_20 = arith.constant 0 : index
    %37 = vector.load %arg8[%c0_19, %c0_20] : memref<2x32xf32, #tpu.memory_space<vmem>>, vector<2x32xf32>
    tpu.vector_store %arg8[%c0_19, %c0_20], %36 {strides = array<i32>} : memref<2x32xf32, #tpu.memory_space<vmem>>, vector<2x32xf32>,
    return
  }
  func.func @transform_0(%arg0: i32) -> (i32, i32, i32) {
    %c0_i32 = arith.constant 0 : i32
    %c0_i32_0 = arith.constant 0 : i32
    %c0_i32_1 = arith.constant 0 : i32
    return %arg0, %c0_i32, %c0_i32_0 : i32, i32, i32
  }
  func.func @transform_1(%arg0: i32) -> (i32, i32) {
    %c0_i32 = arith.constant 0 : i32
    %c0_i32_0 = arith.constant 0 : i32
    return %arg0, %c0_i32 : i32, i32
  }
  func.func @transform_2(%arg0: i32) -> (i32, i32) {
    %c0_i32 = arith.constant 0 : i32
    %c0_i32_0 = arith.constant 0 : i32
    %c0_i32_1 = arith.constant 0 : i32
    return %c0_i32, %c0_i32_0 : i32, i32
  }
  func.func @transform_3(%arg0: i32) -> (i32, i32) {
    %c0_i32 = arith.constant 0 : i32
    %c0_i32_0 = arith.constant 0 : i32
    %c0_i32_1 = arith.constant 0 : i32
    return %c0_i32, %c0_i32_0 : i32, i32
  }
  func.func @transform_4(%arg0: i32) -> (i32, i32) {
    %c0_i32 = arith.constant 0 : i32
    %c0_i32_0 = arith.constant 0 : i32
    %c0_i32_1 = arith.constant 0 : i32
    return %c0_i32, %c0_i32_0 : i32, i32
  }
  func.func @transform_5(%arg0: i32) -> (i32, i32) {
    %c0_i32 = arith.constant 0 : i32
    %c0_i32_0 = arith.constant 0 : i32
    %c0_i32_1 = arith.constant 0 : i32
    return %c0_i32, %c0_i32_0 : i32, i32
  }
  func.func @transform_6(%arg0: i32) -> (i32, i32) {
    %c0_i32 = arith.constant 0 : i32
    %c0_i32_0 = arith.constant 0 : i32
    return %arg0, %c0_i32 : i32, i32
  }
  func.func @transform_7(%arg0: i32) -> (i32, i32) {
    %c0_i32 = arith.constant 0 : i32
    %c0_i32_0 = arith.constant 0 : i32
    return %arg0, %c0_i32 : i32, i32
  }
}

</mosaic_0001>

<llo_original>
// kernel: tpu_custom_call.1
$region0: #{tpu_custom_call.1}
  #allocation0 [shape = 'u32[]', space=smem, size = 0x4, offset = 0x4, fixed_abs, tag = 'smem constant byte address 0x4 - core index']
  #allocation1 [shape = 'u32[144,128]{1,0:T(1,128)}', space=vmem, size = 0x12000, scoped, tag = 'internal scratch']
  %s0 = inlined_call_operand.hbm [shape: f32[2,8,32], index: 0, kind: input, shape index: {}]
  %s1 = inlined_call_operand.vmem [shape: f32[2,8], index: 1, kind: input, shape index: {}]
  %s2 = inlined_call_operand.hbm [shape: f32[32,32], index: 2, kind: input, shape index: {}]
  %s3 = inlined_call_operand.vmem [shape: f32[1,32], index: 3, kind: input, shape index: {}]
  %s4 = inlined_call_operand.vmem [shape: f32[1,32], index: 4, kind: input, shape index: {}]
  %s5 = inlined_call_operand.vmem [shape: f32[1,8], index: 5, kind: input, shape index: {}]
  %s6 = inlined_call_operand.hbm [shape: f32[2,8], index: 6, kind: output, shape index: {0}]
  %s7 = inlined_call_operand.hbm [shape: f32[2,32], index: 7, kind: output, shape index: {1}]
  %8 = xla_tuple %s6, %s7
  %s9 = sld [smem:[#allocation0]]
  $region50: #{tpu_custom_call.1} parent=0
    _
  %s11 = ssub.s32 1, %s9
  %s12 = scalar_select 0, %s11, %s9
  $region1: #{tpu_custom_call.1} parent=0
    #allocation2 [shape = 'u8[8192]{0}', space=vmem, size = 0x2000, scoped, tag = 'input window, operand 0, single buffered']
    #allocation3 [shape = 's32[1]{0}', space=sflag, size = 0x4, scoped, tag = 'scoped memory for tpu_custom_call.1']
    #allocation4 [shape = 's32[1]{0}', space=sflag, size = 0x4, scoped, tag = 'scoped memory for tpu_custom_call.1']
    #allocation5 [shape = 'u8[16384]{0}', space=vmem, size = 0x4000, scoped, tag = 'input window, operand 2, single buffered']
    #allocation6 [shape = 's32[1]{0}', space=sflag, size = 0x4, scoped, tag = 'scoped memory for tpu_custom_call.1']
    #allocation7 [shape = 'u8[1024]{0}', space=vmem, size = 0x400, scoped, tag = 'output window, operand 0, single buffered']
    #allocation8 [shape = 'u8[1024]{0}', space=vmem, size = 0x400, scoped, tag = 'output window, operand 1, single buffered']
    #allocation9 [shape = 's32[1]{0}', space=sflag, size = 0x4, scoped, tag = 'scoped memory for tpu_custom_call.1']
    %13 = vsyncpa [#allocation3], 0
    %14 = vsyncpa [#allocation6], 0
    %15 = vsyncpa [#allocation4], 0
    %16 = vsyncpa [#allocation9], 0
    // Predicated region
    $region2: #{tpu_custom_call.1} parent=1 // pred_check
      _
    $region3: #{tpu_custom_call.1} parent=1 // pred_check_branch
      %18 = sbr.rel (0) target = $region5
    $region4: #{tpu_custom_call.1} parent=1 // pred_region
      %s20 = ssub.s32 256, 256
      %21 = vsyncadd [#allocation3], %s20
      %s22 = sshll.u32 [#allocation2], 4
      %s23 = int_to_ptr.vmem [resolvable:$true] %s22
      %28 = dma.hbm_to_vmem [thread:$0]  %s0, 256, %s23, [#allocation3], 128, 128, 8
    $region5: #{tpu_custom_call.1} parent=1 // pred_fallthru
      _
    // Predicated region
    $region6: #{tpu_custom_call.1} parent=1 // pred_check
      _
    $region7: #{tpu_custom_call.1} parent=1 // pred_check_branch
      %30 = sbr.rel (0) target = $region9
    $region8: #{tpu_custom_call.1} parent=1 // pred_region
      _
    $region9: #{tpu_custom_call.1} parent=1 // pred_fallthru
      _
    // Predicated region
    $region10: #{tpu_custom_call.1} parent=1 // pred_check
      _
    $region11: #{tpu_custom_call.1} parent=1 // pred_check_branch
      %32 = sbr.rel (0) target = $region13
    $region12: #{tpu_custom_call.1} parent=1 // pred_region
      %s34 = ssub.s32 512, 512
      %35 = vsyncadd [#allocation6], %s34
      %s36 = sshll.u32 [#allocation5], 4
      %s37 = int_to_ptr.vmem [resolvable:$true] %s36
      %42 = dma.hbm_to_vmem [thread:$0]  %s2, 512, %s37, [#allocation6], 128, 128, 8
    $region13: #{tpu_custom_call.1} parent=1 // pred_fallthru
      _
    // Predicated region
    $region14: #{tpu_custom_call.1} parent=1 // pred_check
      _
    $region15: #{tpu_custom_call.1} parent=1 // pred_check_branch
      %44 = sbr.rel (0) target = $region17
    $region16: #{tpu_custom_call.1} parent=1 // pred_region
      _
    $region17: #{tpu_custom_call.1} parent=1 // pred_fallthru
      _
    // Predicated region
    $region18: #{tpu_custom_call.1} parent=1 // pred_check
      _
    $region19: #{tpu_custom_call.1} parent=1 // pred_check_branch
      %46 = sbr.rel (0) target = $region21
    $region20: #{tpu_custom_call.1} parent=1 // pred_region
      _
    $region21: #{tpu_custom_call.1} parent=1 // pred_fallthru
      _
    // Predicated region
    $region22: #{tpu_custom_call.1} parent=1 // pred_check
      _
    $region23: #{tpu_custom_call.1} parent=1 // pred_check_branch
      %48 = sbr.rel (0) target = $region25
    $region24: #{tpu_custom_call.1} parent=1 // pred_region
      _
    $region25: #{tpu_custom_call.1} parent=1 // pred_fallthru
      _
    // Predicated region
    $region26: #{tpu_custom_call.1} parent=1 // pred_check
      _
    $region27: #{tpu_custom_call.1} parent=1 // pred_check_branch
      %50 = sbr.rel (0) target = $region29
    $region28: #{tpu_custom_call.1} parent=1 // pred_region
      %51 = dma.done [#allocation3], 256
    $region29: #{tpu_custom_call.1} parent=1 // pred_fallthru
      _
    // Predicated region
    $region30: #{tpu_custom_call.1} parent=1 // pred_check
      _
    $region31: #{tpu_custom_call.1} parent=1 // pred_check_branch
      %53 = sbr.rel (0) target = $region33
    $region32: #{tpu_custom_call.1} parent=1 // pred_region
      %54 = dma.done [#allocation6], 512
    $region33: #{tpu_custom_call.1} parent=1 // pred_fallthru
      _
    %v55 = vld [vmem:[#allocation2] sm:$0xff]
    %v56 = vld [vmem:[#allocation2 + $0x8] sm:$0xff]
    %v57 = vld [vmem:[#allocation5] sm:$0xff]
    %v58 = vld [vmem:[#allocation5 + $0x8] sm:$0xff]
    %v59 = vld [vmem:[#allocation5 + $0x10] sm:$0xff]
    %v60 = vld [vmem:[#allocation5 + $0x18] sm:$0xff]
    %v61 = vld [vmem:[%s3] sm:$0x1]
    %v63 = vlaneseq
    %v64 = vshrl.u32 %v63, 7
    %v65 = vsub.s32 0, %v64
    %v66 = vrot.slane %v61, %v65
    %vm68 = vcmask 261120
    %v70 = vsel %vm68, %v55, 0
    %v73 = vsel %vm68, %v56, 0
    %75 = vmatprep.subr.mxu0 0.0
    %76 = vmatpush1.msra.mxu0 %v57
    %77 = vmatprep.subr.mxu0 0.0
    %78 = vmatpush1.msra.mxu0 %v58
    %79 = vmatprep.subr.mxu0 0.0
    %80 = vmatpush1.msra.mxu0 %v59
    %81 = vmatprep.subr.mxu0 0.0
    %82 = vmatpush1.msra.mxu0 %v60
    %83 = vmatprep.subr.mxu0 0.0
    %84 = vmatpush1.msra.mxu0 0.0
    %85 = vmatprep.subr.mxu0 0.0
    %86 = vmatpush1.msra.mxu0 0.0
    %87 = vmatprep.subr.mxu0 0.0
    %88 = vmatpush1.msra.mxu0 0.0
    %89 = vmatprep.subr.mxu0 0.0
    %90 = vmatpush1.msra.mxu0 0.0
    %91 = vmatprep.subr.mxu0 0.0
    %92 = vmatpush1.msra.mxu0 0.0
    %93 = vmatprep.subr.mxu0 0.0
    %94 = vmatpush1.msra.mxu0 0.0
    %95 = vmatprep.subr.mxu0 0.0
    %96 = vmatpush1.msra.mxu0 0.0
    %97 = vmatprep.subr.mxu0 0.0
    %98 = vmatpush1.msra.mxu0 0.0
    %99 = vmatprep.subr.mxu0 0.0
    %100 = vmatpush1.msra.mxu0 0.0
    %101 = vmatprep.subr.mxu0 0.0
    %102 = vmatpush1.msra.mxu0 0.0
    %103 = vmatprep.subr.mxu0 0.0
    %104 = vmatpush1.msra.mxu0 0.0
    %105 = vmatprep.subr.mxu0 0.0
    %106 = vmatpush1.msra.mxu0 0.0
    %107 = vmatprep.subr.mxu0 0.0
    %108 = vmatpush1.msra.mxu0 0.0
    %109 = vmatprep.subr.mxu0 0.0
    %110 = vmatpush1.msra.mxu0 0.0
    %111 = vmatprep.subr.mxu0 0.0
    %112 = vmatpush1.msra.mxu0 0.0
    %113 = vmatprep.subr.mxu0 0.0
    %114 = vmatpush1.msra.mxu0 0.0
    %115 = vmatprep.subr.mxu0 0.0
    %116 = vmatpush1.msra.mxu0 0.0
    %117 = vmatprep.subr.mxu0 0.0
    %118 = vmatpush1.msra.mxu0 0.0
    %119 = vmatprep.subr.mxu0 0.0
    %120 = vmatpush1.msra.mxu0 0.0
    %121 = vmatprep.subr.mxu0 0.0
    %122 = vmatpush1.msra.mxu0 0.0
    %123 = vmatprep.subr.mxu0 0.0
    %124 = vmatpush1.msra.mxu0 0.0
    %125 = vmatprep.subr.mxu0 0.0
    %126 = vmatpush1.msra.mxu0 0.0
    %127 = vmatprep.subr.mxu0 0.0
    %128 = vmatpush1.msra.mxu0 0.0
    %129 = vmatprep.subr.mxu0 0.0
    %130 = vmatpush1.msra.mxu0 0.0
    %131 = vmatprep.subr.mxu0 0.0
    %132 = vmatpush1.msra.mxu0 0.0
    %133 = vmatprep.subr.mxu0 0.0
    %134 = vmatpush1.msra.mxu0 0.0
    %135 = vmatprep.subr.mxu0 0.0
    %136 = vmatpush1.msra.mxu0 0.0
    %137 = vmatprep.subr.mxu0 0.0
    %138 = vmatpush1.msra.mxu0 0.0
    %139 = vmatprep.mubr.f32.mxu0 0.0
    %140 = vmatmul.mubr.f32.gmra.mrb[0].mxu0 %v70
    %v141 = vpop.f32.mrb[0].mxu0
    %v142 = vadd.f32 %v66, %v141
    %v143 = vpop.f32.mrb[0].mxu0
    %144 = vmatprep.mubr.f32.mxu0 0.0
    %145 = vmatmul.mubr.f32.gmra.mrb[0].mxu0 %v73
    %v146 = vpop.f32.mrb[0].mxu0
    %v147 = vadd.f32 %v66, %v146
    %v148 = vpop.f32.mrb[0].mxu0
    %149 = vdwg.mxu0
    %v150 = vtanh.pop %v142
    %v151 = vtanh.pop %v147
    %v152 = vld [vmem:[%s4] sm:$0x1]
    %v154 = vlaneseq
    %v155 = vshrl.u32 %v154, 7
    %v156 = vsub.s32 0, %v155
    %v157 = vrot.slane %v152, %v156
    %v159 = vmul.f32 %v150, %v157
    %v160 = vmul.f32 %v151, %v157
    %v161 = vsel %vm68, %v159, 0.0
    %162 = vadd.xlane.f32.xlu0 %v161
    %v163 = vpop.xlane.xlu0 %162
    %v164 = vsel %vm68, %v160, 0.0
    %165 = vadd.xlane.f32.xlu0 %v164
    %v166 = vpop.xlane.xlu0 %165
    %v167 = vxor.u32 %v163, 2147483648
    %v168 = vxor.u32 %v166, 2147483648
    %v169 = vmul.f32 %v167, 1.442695
    %v170 = vpow.pop %v169
    %v171 = vmul.f32 %v168, 1.442695
    %v172 = vpow.pop %v171
    %v173 = vadd.f32 %v170, 1.0
    %v174 = vadd.f32 %v172, 1.0
    %v175 = vrcp.pop %v173
    %v176 = vmul.f32 1.0, %v175
    %v177 = vrcp.pop %v174
    %v178 = vmul.f32 1.0, %v177
    %v179 = vld [vmem:[%s1] sm:$0x3]
    %v181 = vlaneseq
    %v182 = vshrl.u32 %v181, 7
    %v183 = vsub.s32 0, %v182
    %v184 = vrot.slane %v179, %v183
    %186 = vbcast.lane.b32.xlu0 %v184, 256
    %v187 = vpop.permute.xlu0 %186
    %v188 = vlaneseq
    %v189 = vshrl.u32 %v188, 7
    %v190 = vsub.s32 1, %v189
    %v191 = vrot.slane %v179, %v190
    %193 = vbcast.lane.b32.xlu0 %v191, 256
    %v194 = vpop.permute.xlu0 %193
    %v197 = vmul.f32 %v176, %v187
    %v198 = vmul.f32 %v178, %v194
    %201 = vset.pattern.permute.xlu0 0
    %202 = vperm.xlu0 %201, %v197
    %v203 = vpop.permute.xlu0 %202
    %204 = vset.pattern.permute.xlu0 0
    %205 = vperm.xlu0 %204, %v198
    %v206 = vpop.permute.xlu0 %205
    %v207 = vlaneseq
    %v208 = vand.u32 %v207, 127
    %v209 = vlaneseq
    %v210 = vshrl.u32 %v209, 7
    %v211 = vsub.s32 %v208, %v210
    %v212 = vrot.slane %v203, %v211
    %v213 = vlaneseq
    %v214 = vshrl.u32 %v213, 7
    %v215 = vsub.s32 %v208, %v214
    %v216 = vrot.slane %v206, %v215
    %vm217 = vcmask 1041409
    %v218 = vsel %vm217, %v216, %v212
    %vm220 = vcmask 58368
    %v221 = vsel %vm220, %v218, 0.0
    %222 = vadd.xlane.f32.xlu0 %v221
    %v223 = vpop.xlane.xlu0 %222
    %v224 = vrcp.pop %v223
    %v226 = vlaneseq
    %v227 = vshrl.u32 %v226, 7
    %v228 = vsub.s32 0, %v227
    %v229 = vrot.slane %v224, %v228
    %v230 = vlaneseq
    %v231 = vshrl.u32 %v230, 7
    %v232 = vsub.s32 1, %v231
    %v233 = vrot.slane %v224, %v232
    %v236 = vmul.f32 %v197, %v229
    %v237 = vmul.f32 %v198, %v233
    %240 = vset.pattern.permute.xlu0 0
    %241 = vperm.xlu0 %240, %v236
    %v242 = vpop.permute.xlu0 %241
    %243 = vset.pattern.permute.xlu0 0
    %244 = vperm.xlu0 %243, %v237
    %v245 = vpop.permute.xlu0 %244
    %v246 = vlaneseq
    %v247 = vshrl.u32 %v246, 7
    %v248 = vsub.s32 %v208, %v247
    %v249 = vrot.slane %v242, %v248
    %v250 = vlaneseq
    %v251 = vshrl.u32 %v250, 7
    %v252 = vsub.s32 %v208, %v251
    %v253 = vrot.slane %v245, %v252
    %v254 = vsel %vm217, %v253, %v249
    %256 = vst.msk [vmem:[#allocation7] sm:$0x3] %vm220, %v254
    %v257 = vld [vmem:[%s5] sm:$0x1]
    %v258 = vlaneseq
    %v259 = vshrl.u32 %v258, 7
    %v260 = vsub.s32 0, %v259
    %v261 = vrot.slane %v257, %v260
    %263 = vbcast.lane.b32.xlu0 %v261, 256
    %v264 = vpop.permute.xlu0 %263
    %v265 = vmul.f32 %v150, %v264
    %v266 = vmul.f32 %v151, %v264
    %v267 = vsel %vm68, %v265, 0.0
    %v268 = vrot.slane %v267, 4
    %v269 = vadd.f32 %v267, %v268
    %v270 = vrot.slane %v269, 2
    %v271 = vadd.f32 %v269, %v270
    %v272 = vrot.slane %v271, 1
    %v273 = vadd.f32 %v271, %v272
    %v274 = vsel %vm68, %v266, 0.0
    %v275 = vrot.slane %v274, 4
    %v276 = vadd.f32 %v274, %v275
    %v277 = vrot.slane %v276, 2
    %v278 = vadd.f32 %v276, %v277
    %v279 = vrot.slane %v278, 1
    %v280 = vadd.f32 %v278, %v279
    %v281 = vxor.u32 %v273, 2147483648
    %v282 = vxor.u32 %v280, 2147483648
    %v283 = vmul.f32 %v281, 1.442695
    %v284 = vpow.pop %v283
    %v285 = vmul.f32 %v282, 1.442695
    %v286 = vpow.pop %v285
    %v287 = vadd.f32 %v284, 1.0
    %v288 = vadd.f32 %v286, 1.0
    %v289 = vrcp.pop %v287
    %v290 = vmul.f32 1.0, %v289
    %v291 = vrcp.pop %v288
    %v292 = vmul.f32 1.0, %v291
    %v295 = vsel %vm217, %v292, %v290
    %vm297 = vcmask 254976
    %298 = vst.msk [vmem:[#allocation8] sm:$0x3] %vm297, %v295
    // Predicated region
    $region34: #{tpu_custom_call.1} parent=1 // pred_check
      _
    $region35: #{tpu_custom_call.1} parent=1 // pred_check_branch
      %300 = sbr.rel (0) target = $region37
    $region36: #{tpu_custom_call.1} parent=1 // pred_region
      %s302 = ssub.s32 32, 32
      %303 = vsyncadd [#allocation4], %s302
      %s305 = sshll.u32 [#allocation7], 4
      %s306 = int_to_ptr.vmem [resolvable:$true] %s305
      %308 = dma.vmem_to_hbm [thread:$0]  %s306, 32, %s6, [#allocation4]
    $region37: #{tpu_custom_call.1} parent=1 // pred_fallthru
      _
    // Predicated region
    $region38: #{tpu_custom_call.1} parent=1 // pred_check
      _
    $region39: #{tpu_custom_call.1} parent=1 // pred_check_branch
      %310 = sbr.rel (0) target = $region41
    $region40: #{tpu_custom_call.1} parent=1 // pred_region
      %s312 = ssub.s32 32, 32
      %313 = vsyncadd [#allocation9], %s312
      %s315 = sshll.u32 [#allocation8], 4
      %s316 = int_to_ptr.vmem [resolvable:$true] %s315
      %318 = dma.vmem_to_hbm [thread:$0]  %s316, 32, %s7, [#allocation9]
    $region41: #{tpu_custom_call.1} parent=1 // pred_fallthru
      _
    // Predicated region
    $region42: #{tpu_custom_call.1} parent=1 // pred_check
      _
    $region43: #{tpu_custom_call.1} parent=1 // pred_check_branch
      %320 = sbr.rel (0) target = $region45
    $region44: #{tpu_custom_call.1} parent=1 // pred_region
      %321 = dma.done [#allocation4], 32
    $region45: #{tpu_custom_call.1} parent=1 // pred_fallthru
      _
    // Predicated region
    $region46: #{tpu_custom_call.1} parent=1 // pred_check
      _
    $region47: #{tpu_custom_call.1} parent=1 // pred_check_branch
      %323 = sbr.rel (0) target = $region49
    $region48: #{tpu_custom_call.1} parent=1 // pred_region
      %324 = dma.done [#allocation9], 32
    $region49: #{tpu_custom_call.1} parent=1 // pred_fallthru
      _
    %325 = vsyncpa [#allocation3], 1
    %326 = vsyncpa [#allocation6], 1
    %327 = vsyncpa [#allocation4], 1
    %328 = vsyncpa [#allocation9], 1

</llo_original>
